<compile_context>
chip_gen: v6e
topology: v6e:2x2x1
jax: 0.10.0
libtpu: 0.0.40
codegen_flags: <defaults>
</compile_context>

<pallas_src>
import random

import numpy as np
import jax
import jax.numpy as jnp
from jax.experimental import pallas as pl
from jax.experimental.pallas import tpu as pltpu


# Conservative budgets that work across v5e / v6e / v7x.
_VMEM_LIMIT_BYTES = 32 * 1024 * 1024   # explicit scoped-VMEM limit (v5e default: 16 MiB)
_FUSED_BLOCK_BUDGET = 24 * 1024 * 1024  # 2 arrays x (in+out) x double-buffered blocks
_SPLIT_BLOCK_BUDGET = 3 * 1024 * 1024   # per-array per-block bytes when row-splitting


# ----------------------------------------------------------------------------
# Kernels: pure relay copies; the prefetched index table is consumed by the
# index_maps only (it picks which input frame is DMA'd for each grid step).
# ----------------------------------------------------------------------------
def _copy2_kernel(idx_ref, f_ref, m_ref, fo_ref, mo_ref):
    fo_ref[...] = f_ref[...]
    mo_ref[...] = m_ref[...]


def _copy1_kernel(idx_ref, x_ref, o_ref):
    o_ref[...] = x_ref[...]


# ----------------------------------------------------------------------------
# Layout helpers.
# ----------------------------------------------------------------------------
def _dense_layout(shape):
    """Factor the per-frame payload into a lane-dense (rows, 128) layout."""
    d = int(np.prod(shape[1:])) if len(shape) > 1 else 1
    if d % 128 == 0:
        return d // 128, 128
    return 1, d  # fallback: single row, full-extent lane dim


def _row_chunk(rows, lanes, itemsize, budget):
    """Largest row-chunk (divisor of rows, multiple of 8) whose block fits `budget`."""
    if rows * lanes * itemsize <= budget:
        return rows
    best = None
    i = 1
    while i * i <= rows:
        if rows % i == 0:
            for c in (i, rows // i):
                if c == rows or c % 8 != 0:
                    continue
                if c * lanes * itemsize <= budget and (best is None or c > best):
                    best = c
        i += 1
    return best if best is not None else rows


# ----------------------------------------------------------------------------
# Pallas gather wrappers.
# ----------------------------------------------------------------------------
def _gather_single(x, idx):
    """out[t] = x[idx[t]] with a row-split (VMEM-budgeted) per-frame DMA gather."""
    t_in = x.shape[0]
    n_out = int(idx.shape[0])
    rows, lanes = _dense_layout(x.shape)
    xf = x.reshape(t_in, rows, lanes)
    rc = _row_chunk(rows, lanes, x.dtype.itemsize, _SPLIT_BLOCK_BUDGET)
    n_split = rows // rc

    grid_spec = pltpu.PrefetchScalarGridSpec(
        num_scalar_prefetch=1,
        grid=(n_out, n_split),
        in_specs=[pl.BlockSpec((1, rc, lanes), lambda t, s, idx: (idx[t], s, 0))],
        out_specs=pl.BlockSpec((1, rc, lanes), lambda t, s, idx: (t, s, 0)),
    )
    out = pl.pallas_call(
        _copy1_kernel,
        out_shape=jax.ShapeDtypeStruct((n_out, rows, lanes), x.dtype),
        grid_spec=grid_spec,
        compiler_params=pltpu.CompilerParams(
            dimension_semantics=("parallel", "parallel"),
            vmem_limit_bytes=_VMEM_LIMIT_BYTES,
        ),
    )(idx, xf)
    return out.reshape((n_out,) + x.shape[1:])


def _gather_fused(frames, mask, idx):
    """Fused gather of frames and mask: one pallas_call, one grid, one index table."""
    t_in = frames.shape[0]
    n_out = int(idx.shape[0])
    fr, fl = _dense_layout(frames.shape)
    mr, ml = _dense_layout(mask.shape)
    ff = frames.reshape(t_in, fr, fl)
    mf = mask.reshape(t_in, mr, ml)

    grid_spec = pltpu.PrefetchScalarGridSpec(
        num_scalar_prefetch=1,
        grid=(n_out,),
        in_specs=[
            pl.BlockSpec((1, fr, fl), lambda t, idx: (idx[t], 0, 0)),
            pl.BlockSpec((1, mr, ml), lambda t, idx: (idx[t], 0, 0)),
        ],
        out_specs=[
            pl.BlockSpec((1, fr, fl), lambda t, idx: (t, 0, 0)),
            pl.BlockSpec((1, mr, ml), lambda t, idx: (t, 0, 0)),
        ],
    )
    new_f, new_m = pl.pallas_call(
        _copy2_kernel,
        out_shape=(
            jax.ShapeDtypeStruct((n_out, fr, fl), frames.dtype),
            jax.ShapeDtypeStruct((n_out, mr, ml), mask.dtype),
        ),
        grid_spec=grid_spec,
        compiler_params=pltpu.CompilerParams(
            dimension_semantics=("parallel",),
            vmem_limit_bytes=_VMEM_LIMIT_BYTES,
        ),
    )(idx, ff, mf)
    return (new_f.reshape((n_out,) + frames.shape[1:]),
            new_m.reshape((n_out,) + mask.shape[1:]))


def gather_frames(frames, idx, mask=None):
    """out[t] = frames[idx[t]] (and mask[idx[t]]) — dtype-agnostic, lane-dense."""
    idx = jnp.asarray(idx, dtype=jnp.int32)
    if mask is None:
        return _gather_single(frames, idx), None
    fr, fl = _dense_layout(frames.shape)
    mr, ml = _dense_layout(mask.shape)
    fused_bytes = 4 * (fr * fl * frames.dtype.itemsize + mr * ml * mask.dtype.itemsize)
    if fused_bytes <= _FUSED_BLOCK_BUDGET:
        return _gather_fused(frames, mask, idx)
    # Very large frames: independent gathers with row-splitting keep blocks in VMEM.
    return _gather_single(frames, idx), _gather_single(mask, idx)


# ----------------------------------------------------------------------------
# SpeedChange: host-side speed-factor / index-table logic mirrors the PyTorch
# module; the frame gather runs in Pallas.
# ----------------------------------------------------------------------------
class SpeedChange:
    """Changes the speed of the video by duplicating or dropping frames."""

    def __init__(self, min_speed=0.5, max_speed=1.5):
        self.min_speed = min_speed
        self.max_speed = max_speed

    def get_random_speed(self):
        if self.min_speed is None or self.max_speed is None:
            raise ValueError("min_speed and max_speed must be provided")
        return random.uniform(self.min_speed, self.max_speed)

    @staticmethod
    def speed_indices(num_frames, speed_factor):
        """Frame index table, matching torch.linspace/round/clamp semantics."""
        if speed_factor < 1.0:
            n = int(num_frames / speed_factor)
            pts = np.linspace(0.0, num_frames - 1, n)
        else:
            n = int(num_frames * speed_factor)
            pts = np.linspace(0.0, num_frames - 1, n)[:num_frames]
        return np.clip(np.rint(pts), 0, num_frames - 1).astype(np.int32)

    def __call__(self, frames, mask=None, speed_factor=None, *args, **kwargs):
        num_frames = frames.shape[0]
        speed_factor = speed_factor if speed_factor is not None else self.get_random_speed()
        if speed_factor == 1.0:
            return frames, mask
        idx = self.speed_indices(num_frames, speed_factor)
        # Identity gather -> skip the kernel entirely (zero HBM traffic).
        if idx.shape[0] == num_frames and np.array_equal(idx, np.arange(num_frames)):
            return frames, mask
        new_frames, new_mask = gather_frames(frames, jnp.asarray(idx), mask)
        return new_frames, new_mask

    def __repr__(self) -> str:
        return f"SpeedChange(min_speed={self.min_speed}, max_speed={self.max_speed})"


if __name__ == "__main__":
    random.seed(0)
    key = jax.random.PRNGKey(0)

    T, C, H, W = 8, 4, 16, 16  # (T, C, H, W) -- PyTorch-style video tensor
    kf, km = jax.random.split(key)
    frames = jax.random.normal(kf, (T, C, H, W), dtype=jnp.float32)
    mask = (jax.random.uniform(km, (T, 1, H, W)) > 0.5).astype(jnp.float32)

    aug = SpeedChange(min_speed=0.5, max_speed=1.5)

    # Slow down: speed_factor = 0.5 -> 16 output frames (duplicates), fused frames+mask.
    out_f, out_m = aug(frames, mask, speed_factor=0.5)
    out_f = jax.block_until_ready(out_f)
    out_m = jax.block_until_ready(out_m)
    idx = SpeedChange.speed_indices(T, 0.5)
    assert out_f.shape == (len(idx), C, H, W) and out_f.dtype == frames.dtype
    assert jnp.array_equal(out_f, frames[jnp.asarray(idx)])
    assert jnp.array_equal(out_m, mask[jnp.asarray(idx)])

    # Speed up: speed_factor = 1.5 -> frames dropped/compressed.
    out_f2, out_m2 = aug(frames, mask, speed_factor=1.5)
    out_f2 = jax.block_until_ready(out_f2)
    out_m2 = jax.block_until_ready(out_m2)
    idx2 = SpeedChange.speed_indices(T, 1.5)
    assert jnp.array_equal(out_f2, frames[jnp.asarray(idx2)])
    assert jnp.array_equal(out_m2, mask[jnp.asarray(idx2)])

    # speed_factor == 1.0 is a pure no-op (kernel skipped).
    same_f, same_m = aug(frames, mask, speed_factor=1.0)
    assert same_f is frames and same_m is mask

    # Frames-only path (no mask) with a random speed factor.
    out_f3, none_m = aug(frames, None)
    jax.block_until_ready(out_f3)
    assert none_m is None

    # Dtype-agnostic: bf16 source frames move half the HBM bytes of f32 (no upcast).
    frames_bf16 = frames.astype(jnp.bfloat16)
    out_bf16, _ = aug(frames_bf16, None, speed_factor=0.75)
    out_bf16 = jax.block_until_ready(out_bf16)
    idx3 = SpeedChange.speed_indices(T, 0.75)
    assert out_bf16.dtype == jnp.bfloat16
    assert jnp.array_equal(out_bf16, frames_bf16[jnp.asarray(idx3)])

    print("KERNEL_OK")
</pallas_src>

<mosaic_0001>
module attributes {stable_mosaic.version = 11 : i64} {
  func.func @_copy2_kernel(%arg0: i32, %arg1: memref<16xi32, #tpu.memory_space<smem>>, %arg2: memref<1x8x128xf32, #tpu.memory_space<vmem>>, %arg3: memref<1x2x128xf32, #tpu.memory_space<vmem>>, %arg4: memref<1x8x128xf32, #tpu.memory_space<vmem>>, %arg5: memref<1x2x128xf32, #tpu.memory_space<vmem>>) attributes {dimension_semantics = [#tpu.dimension_semantics<parallel>], iteration_bounds = array<i64: 16>, scalar_prefetch = 1 : i64, scratch_operands = 0 : i64, tpu.core_type = #tpu.core_type<tc>, window_params = [{transform_indices = @transform_0, window_bounds = array<i64: 1, 8, 128>}, {transform_indices = @transform_1, window_bounds = array<i64: 1, 2, 128>}, {transform_indices = @transform_2, window_bounds = array<i64: 1, 8, 128>}, {transform_indices = @transform_3, window_bounds = array<i64: 1, 2, 128>}]} {
    %c0 = arith.constant 0 : index
    %c0_0 = arith.constant 0 : index
    %c0_1 = arith.constant 0 : index
    %0 = vector.load %arg2[%c0, %c0_0, %c0_1] : memref<1x8x128xf32, #tpu.memory_space<vmem>>, vector<1x8x128xf32>
    %c0_2 = arith.constant 0 : index
    %c0_3 = arith.constant 0 : index
    %c0_4 = arith.constant 0 : index
    %1 = vector.load %arg4[%c0_2, %c0_3, %c0_4] : memref<1x8x128xf32, #tpu.memory_space<vmem>>, vector<1x8x128xf32>
    tpu.vector_store %arg4[%c0_2, %c0_3, %c0_4], %0 {strides = array<i32>} : memref<1x8x128xf32, #tpu.memory_space<vmem>>, vector<1x8x128xf32>,
    %c0_5 = arith.constant 0 : index
    %c0_6 = arith.constant 0 : index
    %c0_7 = arith.constant 0 : index
    %2 = vector.load %arg3[%c0_5, %c0_6, %c0_7] : memref<1x2x128xf32, #tpu.memory_space<vmem>>, vector<1x2x128xf32>
    %c0_8 = arith.constant 0 : index
    %c0_9 = arith.constant 0 : index
    %c0_10 = arith.constant 0 : index
    %3 = vector.load %arg5[%c0_8, %c0_9, %c0_10] : memref<1x2x128xf32, #tpu.memory_space<vmem>>, vector<1x2x128xf32>
    tpu.vector_store %arg5[%c0_8, %c0_9, %c0_10], %2 {strides = array<i32>} : memref<1x2x128xf32, #tpu.memory_space<vmem>>, vector<1x2x128xf32>,
    return
  }
  func.func @transform_0(%arg0: i32, %arg1: memref<16xi32, #tpu.memory_space<smem>>) -> (i32, i32, i32) {
    %0 = arith.index_cast %arg0 : i32 to index
    %1 = memref.load %arg1[%0] : memref<16xi32, #tpu.memory_space<smem>>
    %c0_i32 = arith.constant 0 : i32
    %c0_i32_0 = arith.constant 0 : i32
    %c0_i32_1 = arith.constant 0 : i32
    return %1, %c0_i32, %c0_i32_0 : i32, i32, i32
  }
  func.func @transform_1(%arg0: i32, %arg1: memref<16xi32, #tpu.memory_space<smem>>) -> (i32, i32, i32) {
    %0 = arith.index_cast %arg0 : i32 to index
    %1 = memref.load %arg1[%0] : memref<16xi32, #tpu.memory_space<smem>>
    %c0_i32 = arith.constant 0 : i32
    %c0_i32_0 = arith.constant 0 : i32
    %c0_i32_1 = arith.constant 0 : i32
    return %1, %c0_i32, %c0_i32_0 : i32, i32, i32
  }
  func.func @transform_2(%arg0: i32, %arg1: memref<16xi32, #tpu.memory_space<smem>>) -> (i32, i32, i32) {
    %c0_i32 = arith.constant 0 : i32
    %c0_i32_0 = arith.constant 0 : i32
    %c0_i32_1 = arith.constant 0 : i32
    return %arg0, %c0_i32, %c0_i32_0 : i32, i32, i32
  }
  func.func @transform_3(%arg0: i32, %arg1: memref<16xi32, #tpu.memory_space<smem>>) -> (i32, i32, i32) {
    %c0_i32 = arith.constant 0 : i32
    %c0_i32_0 = arith.constant 0 : i32
    %c0_i32_1 = arith.constant 0 : i32
    return %arg0, %c0_i32, %c0_i32_0 : i32, i32, i32
  }
}

</mosaic_0001>

<llo_original>
// kernel: tpu_custom_call.1
$region0: #{tpu_custom_call.1}
  #allocation0 [shape = 'u32[]', space=smem, size = 0x4, offset = 0x4, fixed_abs, tag = 'smem constant byte address 0x4 - core index']
  #allocation1 [shape = 'u32[144,128]{1,0:T(1,128)}', space=vmem, size = 0x12000, scoped, tag = 'internal scratch']
  #allocation2 [shape = 's32[1]{0}', space=sflag, size = 0x4, scoped, tag = 'scoped memory for tpu_custom_call.1']
  #allocation3 [shape = 'u8[512]{0}', space=smem, size = 0x200, scoped, tag = 'prefetched SMEM operand 0']
  %s0 = inlined_call_operand.hbm [shape: s32[16], index: 0, kind: input, shape index: {}]
  %s1 = inlined_call_operand.hbm [shape: f32[8,8,128], index: 1, kind: input, shape index: {}]
  %s2 = inlined_call_operand.hbm [shape: f32[8,2,128], index: 2, kind: input, shape index: {}]
  %s3 = inlined_call_operand.hbm [shape: f32[16,8,128], index: 3, kind: output, shape index: {0}]
  %s4 = inlined_call_operand.hbm [shape: f32[16,2,128], index: 4, kind: output, shape index: {1}]
  %5 = xla_tuple %s3, %s4
  %s6 = sld [smem:[#allocation0]]
  $region57: #{tpu_custom_call.1} parent=0
    _
  %s8 = ssub.s32 1, %s6
  %s9 = scalar_select 0, %s8, %s6
  %11 = dma.hbm_to_smem %s0, 16, [#allocation3], [#allocation2]
  %12 = dma.done [#allocation2], 16
  %13 = sfence
  $region1: #{tpu_custom_call.1} parent=0
    #allocation4 [shape = 'u8[8192]{0}', space=vmem, size = 0x2000, scoped, tag = 'input window, operand 1']
    #allocation5 [shape = 's32[2]{0}', space=sflag, size = 0x8, scoped, tag = 'scoped memory for tpu_custom_call.1']
    #allocation6 [shape = 's32[2]{0}', space=sflag, size = 0x8, scoped, tag = 'scoped memory for tpu_custom_call.1']
    #allocation7 [shape = 'u8[2048]{0}', space=vmem, size = 0x800, scoped, tag = 'input window, operand 2']
    #allocation8 [shape = 's32[2]{0}', space=sflag, size = 0x8, scoped, tag = 'scoped memory for tpu_custom_call.1']
    #allocation9 [shape = 'u8[8192]{0}', space=vmem, size = 0x2000, scoped, tag = 'output window, operand 0']
    #allocation10 [shape = 'u8[2048]{0}', space=vmem, size = 0x800, scoped, tag = 'output window, operand 1']
    #allocation11 [shape = 's32[2]{0}', space=sflag, size = 0x8, scoped, tag = 'scoped memory for tpu_custom_call.1']
    %14 = vsyncpa [#allocation5], 0
    %s15 = scalar_lea.sflag [#allocation5], 1
    %16 = vsyncpa %s15, 0
    %17 = vsyncpa [#allocation8], 0
    %s18 = scalar_lea.sflag [#allocation8], 1
    %19 = vsyncpa %s18, 0
    %20 = vsyncpa [#allocation6], 0
    %s21 = scalar_lea.sflag [#allocation6], 1
    %22 = vsyncpa %s21, 0
    %23 = vsyncpa [#allocation11], 0
    %s24 = scalar_lea.sflag [#allocation11], 1
    %25 = vsyncpa %s24, 0
    loop: start=0, step=1, limit=18
    $region2: #{tpu_custom_call.1} parent=1 // loop_pre_header
      _
    $region3: #{tpu_custom_call.1} parent=1 // loop_header
      %s27 = sphi 0, %s31
      %p28 = scmp.ge.s32.totalorder %s27, 18
      %s39 = sphi 0, %s41
      %s42 = sphi 0, %s39
      %s43 = sphi 0, %s42
      %s59 = sphi 0, %s43
      %s67 = sphi 0, %s69
      %s70 = sphi 0, %s67
      %s71 = sphi 0, %s70
      %s87 = sphi 0, %s71
      %s93 = sphi 0, %s95
      %s96 = sphi 0, %s93
      %s97 = sphi 0, %s96
      %s113 = sphi 0, %s97
      %s119 = sphi 0, %s121
      %s122 = sphi 0, %s119
      %s123 = sphi 0, %s122
      %s139 = sphi 0, %s123
    $region4: #{tpu_custom_call.1} parent=1 // loop_header_branch
      %30 = sbr.rel (%p28) target = $region8
    $region5: #{tpu_custom_call.1} parent=1 // loop_body
      %s32 = ssub.s32 %s27, 1
      %s33 = ssub.s32 %s27, 2
      %s34 = sadd.s32 %s27, 1
      %s35 = sld [smem:[#allocation3 + %s27]]
      %s36 = sld [smem:[#allocation3 + %s34]]
      %s37 = ssub.s32 %s35, %s36
      %p38 = scmp.eq.s32.totalorder %s37, 0
      %s40 = sadd.s32 %s39, 1
      %s41 = scalar_select %p38, %s39, %s40
      %p44 = pneg %p38
      %p45 = scmp.eq.s32.totalorder %s27, 15
      %p46 = por %p44, %p45
      %p47 = scmp.ne.s32.totalorder %s39, %s42
      %p48 = scmp.eq.s32.totalorder %s27, 0
      %p49 = por %p47, %p48
      %p50 = scmp.ne.s32.totalorder %s39, %s42
      %p51 = scmp.eq.s32.totalorder %s32, 15
      %p52 = por %p50, %p51
      %p53 = scmp.ne.s32.totalorder %s42, %s43
      %p54 = scmp.eq.s32.totalorder %s32, 0
      %p55 = por %p53, %p54
      %p56 = scmp.ne.s32.totalorder %s42, %s43
      %p57 = scmp.eq.s32.totalorder %s33, 15
      %p58 = por %p56, %p57
      %p60 = scmp.ne.s32.totalorder %s43, %s59
      %p61 = scmp.eq.s32.totalorder %s33, 0
      %p62 = por %p60, %p61
      %s63 = sld [smem:[#allocation3 + %s27]]
      %s64 = sld [smem:[#allocation3 + %s34]]
      %s65 = ssub.s32 %s63, %s64
      %p66 = scmp.eq.s32.totalorder %s65, 0
      %s68 = sadd.s32 %s67, 1
      %s69 = scalar_select %p66, %s67, %s68
      %p72 = pneg %p66
      %p73 = scmp.eq.s32.totalorder %s27, 15
      %p74 = por %p72, %p73
      %p75 = scmp.ne.s32.totalorder %s67, %s70
      %p76 = scmp.eq.s32.totalorder %s27, 0
      %p77 = por %p75, %p76
      %p78 = scmp.ne.s32.totalorder %s67, %s70
      %p79 = scmp.eq.s32.totalorder %s32, 15
      %p80 = por %p78, %p79
      %p81 = scmp.ne.s32.totalorder %s70, %s71
      %p82 = scmp.eq.s32.totalorder %s32, 0
      %p83 = por %p81, %p82
      %p84 = scmp.ne.s32.totalorder %s70, %s71
      %p85 = scmp.eq.s32.totalorder %s33, 15
      %p86 = por %p84, %p85
      %p88 = scmp.ne.s32.totalorder %s71, %s87
      %p89 = scmp.eq.s32.totalorder %s33, 0
      %p90 = por %p88, %p89
      %s91 = ssub.s32 %s27, %s34
      %p92 = scmp.eq.s32.totalorder %s91, 0
      %s94 = sadd.s32 %s93, 1
      %s95 = scalar_select %p92, %s93, %s94
      %p98 = pneg %p92
      %p99 = scmp.eq.s32.totalorder %s27, 15
      %p100 = por %p98, %p99
      %p101 = scmp.ne.s32.totalorder %s93, %s96
      %p102 = scmp.eq.s32.totalorder %s27, 0
      %p103 = por %p101, %p102
      %p104 = scmp.ne.s32.totalorder %s93, %s96
      %p105 = scmp.eq.s32.totalorder %s32, 15
      %p106 = por %p104, %p105
      %p107 = scmp.ne.s32.totalorder %s96, %s97
      %p108 = scmp.eq.s32.totalorder %s32, 0
      %p109 = por %p107, %p108
      %p110 = scmp.ne.s32.totalorder %s96, %s97
      %p111 = scmp.eq.s32.totalorder %s33, 15
      %p112 = por %p110, %p111
      %p114 = scmp.ne.s32.totalorder %s97, %s113
      %p115 = scmp.eq.s32.totalorder %s33, 0
      %p116 = por %p114, %p115
      %s117 = ssub.s32 %s27, %s34
      %p118 = scmp.eq.s32.totalorder %s117, 0
      %s120 = sadd.s32 %s119, 1
      %s121 = scalar_select %p118, %s119, %s120
      %p124 = pneg %p118
      %p125 = scmp.eq.s32.totalorder %s27, 15
      %p126 = por %p124, %p125
      %p127 = scmp.ne.s32.totalorder %s119, %s122
      %p128 = scmp.eq.s32.totalorder %s27, 0
      %p129 = por %p127, %p128
      %p130 = scmp.ne.s32.totalorder %s119, %s122
      %p131 = scmp.eq.s32.totalorder %s32, 15
      %p132 = por %p130, %p131
      %p133 = scmp.ne.s32.totalorder %s122, %s123
      %p134 = scmp.eq.s32.totalorder %s32, 0
      %p135 = por %p133, %p134
      %p136 = scmp.ne.s32.totalorder %s122, %s123
      %p137 = scmp.eq.s32.totalorder %s33, 15
      %p138 = por %p136, %p137
      %p140 = scmp.ne.s32.totalorder %s123, %s139
      %p141 = scmp.eq.s32.totalorder %s33, 0
      %p142 = por %p140, %p141
      %p143 = scmp.le.s32.totalorder 1, %s27
      %p144 = scmp.lt.s32.totalorder %s27, 17
      %p145 = pnand %p143, %p144
      %p146 = pneg %p145
      // Predicated region
      $region9: #{tpu_custom_call.1} parent=5 // pred_check
        _
      $region10: #{tpu_custom_call.1} parent=5 // pred_check_branch
        %148 = sbr.rel (%p145) target = $region12
      $region11: #{tpu_custom_call.1} parent=5 // pred_region
        %s149 = ssub.s32 %s27, 1
      $region12: #{tpu_custom_call.1} parent=5 // pred_fallthru
        _
      %p150 = scmp.lt.s32.totalorder %s27, 16
      // Predicated region
      $region13: #{tpu_custom_call.1} parent=5 // pred_check
        %p151 = pneg %p150
      $region14: #{tpu_custom_call.1} parent=5 // pred_check_branch
        %153 = sbr.rel (%p151) target = $region16
      $region15: #{tpu_custom_call.1} parent=5 // pred_region
        // Predicated region
        $region17: #{tpu_custom_call.1} parent=15 // pred_check
          %p154 = pneg %p49
        $region18: #{tpu_custom_call.1} parent=15 // pred_check_branch
          %156 = sbr.rel (%p154) target = $region20
        $region19: #{tpu_custom_call.1} parent=15 // pred_region
          %s157 = sand.u32 %s39, 1
          %s158 = scalar_lea.sflag [#allocation5], %s157
          %s159 = sand.u32 %s39, 1
          %s160 = smul.addr %s159, 8
          %s161 = scalar_lea.vmem [#allocation4], %s160
          %s162 = sld [smem:[#allocation3 + %s27]]
          %s164 = ssub.s32 128, 128
          %165 = vsyncadd %s158, %s164
          %s166 = smul.addr %s162, 128
          %s167 = scalar_lea.hbm %s1, %s166
          %s169 = sshll.u32 %s161, 4
          %s170 = int_to_ptr.vmem [resolvable:$true] %s169
          %172 = dma.hbm_to_vmem [thread:$0]  %s167, 128, %s170, %s158
        $region20: #{tpu_custom_call.1} parent=15 // pred_fallthru
          _
        // Predicated region
        $region21: #{tpu_custom_call.1} parent=15 // pred_check
          %p173 = pneg %p77
        $region22: #{tpu_custom_call.1} parent=15 // pred_check_branch
          %175 = sbr.rel (%p173) target = $region24
        $region23: #{tpu_custom_call.1} parent=15 // pred_region
          %s176 = sand.u32 %s67, 1
          %s177 = scalar_lea.sflag [#allocation8], %s176
          %s178 = sand.u32 %s67, 1
          %s179 = smul.addr %s178, 2
          %s180 = scalar_lea.vmem [#allocation7], %s179
          %s181 = sld [smem:[#allocation3 + %s27]]
          %s183 = ssub.s32 32, 32
          %184 = vsyncadd %s177, %s183
          %s185 = smul.addr %s181, 32
          %s186 = scalar_lea.hbm %s2, %s185
          %s188 = sshll.u32 %s180, 4
          %s189 = int_to_ptr.vmem [resolvable:$true] %s188
          %191 = dma.hbm_to_vmem [thread:$0]  %s186, 32, %s189, %s177
        $region24: #{tpu_custom_call.1} parent=15 // pred_fallthru
          _
      $region16: #{tpu_custom_call.1} parent=5 // pred_fallthru
        _
      %p192 = scmp.le.s32.totalorder 1, %s27
      %p193 = scmp.lt.s32.totalorder %s27, 17
      %p194 = pnand %p192, %p193
      %p195 = pneg %p194
      // Predicated region
      $region25: #{tpu_custom_call.1} parent=5 // pred_check
        _
      $region26: #{tpu_custom_call.1} parent=5 // pred_check_branch
        %197 = sbr.rel (%p194) target = $region28
      $region27: #{tpu_custom_call.1} parent=5 // pred_region
        %s198 = ssub.s32 %s27, 1
        %s199 = sand.u32 %s42, 1
        %s200 = scalar_lea.sflag [#allocation5], %s199
        %s201 = sand.u32 %s42, 1
        %s202 = smul.addr %s201, 8
        %s203 = scalar_lea.vmem [#allocation4], %s202
        // Predicated region
        $region29: #{tpu_custom_call.1} parent=27 // pred_check
          %p204 = pneg %p55
        $region30: #{tpu_custom_call.1} parent=27 // pred_check_branch
          %206 = sbr.rel (%p204) target = $region32
        $region31: #{tpu_custom_call.1} parent=27 // pred_region
          %207 = dma.done %s200, 128
        $region32: #{tpu_custom_call.1} parent=27 // pred_fallthru
          _
        %s208 = sand.u32 %s70, 1
        %s209 = scalar_lea.sflag [#allocation8], %s208
        %s210 = sand.u32 %s70, 1
        %s211 = smul.addr %s210, 2
        %s212 = scalar_lea.vmem [#allocation7], %s211
        // Predicated region
        $region33: #{tpu_custom_call.1} parent=27 // pred_check
          %p213 = pneg %p83
        $region34: #{tpu_custom_call.1} parent=27 // pred_check_branch
          %215 = sbr.rel (%p213) target = $region36
        $region35: #{tpu_custom_call.1} parent=27 // pred_region
          %216 = dma.done %s209, 32
        $region36: #{tpu_custom_call.1} parent=27 // pred_fallthru
          _
        %s217 = sand.u32 %s42, 1
        %s218 = scalar_lea.sflag [#allocation5], %s217
        %s219 = sand.u32 %s42, 1
        %s220 = smul.addr %s219, 8
        %s221 = scalar_lea.vmem [#allocation4], %s220
        %p222 = pneg %p55
        %p223 = pneg %p52
        %s224 = sand.u32 %s70, 1
        %s225 = scalar_lea.sflag [#allocation8], %s224
        %s226 = sand.u32 %s70, 1
        %s227 = smul.addr %s226, 2
        %s228 = scalar_lea.vmem [#allocation7], %s227
        %p229 = pneg %p83
        %p230 = pneg %p80
        %p231 = pneg %p109
        %p232 = pneg %p106
        %s233 = sand.u32 %s96, 1
        %s234 = scalar_lea.sflag [#allocation6], %s233
        %s235 = sand.u32 %s96, 1
        %s236 = smul.addr %s235, 8
        %s237 = scalar_lea.vmem [#allocation9], %s236
        %p238 = pneg %p135
        %p239 = pneg %p132
        %s240 = sand.u32 %s122, 1
        %s241 = scalar_lea.sflag [#allocation11], %s240
        %s242 = sand.u32 %s122, 1
        %s243 = smul.addr %s242, 2
        %s244 = scalar_lea.vmem [#allocation10], %s243
        %s245 = sld [smem:[#allocation3 + %s32]]
        %s246 = sld [smem:[#allocation3 + %s32]]
        %v247 = vld [vmem:[%s203] sm:$0xff]
        %248 = vst [vmem:[%s237] sm:$0xff] %v247
        %v249 = vld [vmem:[%s212] sm:$0x3]
        %250 = vst [vmem:[%s244] sm:$0x3] %v249
        %s251 = sand.u32 %s96, 1
        %s252 = scalar_lea.sflag [#allocation6], %s251
        %s253 = sand.u32 %s96, 1
        %s254 = smul.addr %s253, 8
        %s255 = scalar_lea.vmem [#allocation9], %s254
        %s256 = sand.u32 %s122, 1
        %s257 = scalar_lea.sflag [#allocation11], %s256
        %s258 = sand.u32 %s122, 1
        %s259 = smul.addr %s258, 2
        %s260 = scalar_lea.vmem [#allocation10], %s259
        // Predicated region
        $region37: #{tpu_custom_call.1} parent=27 // pred_check
          %p261 = pneg %p106
        $region38: #{tpu_custom_call.1} parent=27 // pred_check_branch
          %263 = sbr.rel (%p261) target = $region40
        $region39: #{tpu_custom_call.1} parent=27 // pred_region
          %s265 = ssub.s32 128, 128
          %266 = vsyncadd %s252, %s265
          %s267 = smul.addr %s32, 128
          %s268 = scalar_lea.hbm %s3, %s267
          %s270 = sshll.u32 %s255, 4
          %s271 = int_to_ptr.vmem [resolvable:$true] %s270
          %273 = dma.vmem_to_hbm [thread:$0]  %s271, 128, %s268, %s252
        $region40: #{tpu_custom_call.1} parent=27 // pred_fallthru
          _
        // Predicated region
        $region41: #{tpu_custom_call.1} parent=27 // pred_check
          %p274 = pneg %p132
        $region42: #{tpu_custom_call.1} parent=27 // pred_check_branch
          %276 = sbr.rel (%p274) target = $region44
        $region43: #{tpu_custom_call.1} parent=27 // pred_region
          %s278 = ssub.s32 32, 32
          %279 = vsyncadd %s257, %s278
          %s280 = smul.addr %s32, 32
          %s281 = scalar_lea.hbm %s4, %s280
          %s283 = sshll.u32 %s260, 4
          %s284 = int_to_ptr.vmem [resolvable:$true] %s283
          %286 = dma.vmem_to_hbm [thread:$0]  %s284, 32, %s281, %s257
        $region44: #{tpu_custom_call.1} parent=27 // pred_fallthru
          _
      $region28: #{tpu_custom_call.1} parent=5 // pred_fallthru
        _
      %p287 = scmp.le.s32.totalorder 2, %s27
      // Predicated region
      $region45: #{tpu_custom_call.1} parent=5 // pred_check
        %p288 = pneg %p287
      $region46: #{tpu_custom_call.1} parent=5 // pred_check_branch
        %290 = sbr.rel (%p288) target = $region48
      $region47: #{tpu_custom_call.1} parent=5 // pred_region
        %s291 = ssub.s32 %s27, 2
        // Predicated region
        $region49: #{tpu_custom_call.1} parent=47 // pred_check
          %p292 = pneg %p112
        $region50: #{tpu_custom_call.1} parent=47 // pred_check_branch
          %294 = sbr.rel (%p292) target = $region52
        $region51: #{tpu_custom_call.1} parent=47 // pred_region
          %s295 = sand.u32 %s97, 1
          %s296 = scalar_lea.sflag [#allocation6], %s295
          %s297 = sand.u32 %s97, 1
          %s298 = smul.addr %s297, 8
          %s299 = scalar_lea.vmem [#allocation9], %s298
          %300 = dma.done %s296, 128
        $region52: #{tpu_custom_call.1} parent=47 // pred_fallthru
          _
        // Predicated region
        $region53: #{tpu_custom_call.1} parent=47 // pred_check
          %p301 = pneg %p138
        $region54: #{tpu_custom_call.1} parent=47 // pred_check_branch
          %303 = sbr.rel (%p301) target = $region56
        $region55: #{tpu_custom_call.1} parent=47 // pred_region
          %s304 = sand.u32 %s123, 1
          %s305 = scalar_lea.sflag [#allocation11], %s304
          %s306 = sand.u32 %s123, 1
          %s307 = smul.addr %s306, 2
          %s308 = scalar_lea.vmem [#allocation10], %s307
          %309 = dma.done %s305, 32
        $region56: #{tpu_custom_call.1} parent=47 // pred_fallthru
          _
      $region48: #{tpu_custom_call.1} parent=5 // pred_fallthru
        _
    $region6: #{tpu_custom_call.1} parent=1 // loop_footer
      %s31 = sadd.s32 1, %s27
    $region7: #{tpu_custom_call.1} parent=1 // loop_footer_branch
      %26 = sbr.rel target = $region3
    $region8: #{tpu_custom_call.1} parent=1 // loop_exit
      _
    %310 = vsyncpa [#allocation5], 1
    %s311 = scalar_lea.sflag [#allocation5], 1
    %312 = vsyncpa %s311, 1
    %313 = vsyncpa [#allocation8], 1
    %s314 = scalar_lea.sflag [#allocation8], 1
    %315 = vsyncpa %s314, 1
    %316 = vsyncpa [#allocation6], 1
    %s317 = scalar_lea.sflag [#allocation6], 1
    %318 = vsyncpa %s317, 1
    %319 = vsyncpa [#allocation11], 1
    %s320 = scalar_lea.sflag [#allocation11], 1
    %321 = vsyncpa %s320, 1

</llo_original>
